<compile_context>
chip_gen: v6e
topology: v6e:2x2x1
jax: 0.10.0
libtpu: 0.0.40
codegen_flags: <defaults>
</compile_context>

<pallas_src>
import jax
import jax.numpy as jnp
from jax.experimental import pallas as pl
from jax.experimental.pallas import tpu as pltpu

LANE = 128          # TPU lane width (last dim)
SUBLANE = 8         # f32 sublane count (second-to-last dim)
NUM_LAYERS = 5


def _round_up(n, m):
    return ((n + m - 1) // m) * m


def _choose_tb(batch, batch_tile):
    """Pick the batch tile.

    - Large batches: cap at batch_tile (default 2048; ~2.5 MB VMEM including
      double-buffered activation tiles -> far under every generation's limit).
    - Smaller batches: split into >= 2 sublane-aligned tiles when possible so
      the 'parallel' grid axis gives both v7x TensorCores work.
    - Tiny batches: a single tile equal to the full batch (always a legal
      block shape).
    """
    if batch > batch_tile:
        return batch_tile
    half = _round_up((batch + 1) // 2, SUBLANE)
    if half < batch:
        return half
    return batch


# --------------------------------------------------------------------------
# Kernel: whole 5-layer MLP on one (TB, in_size) activation tile.
#   x_ref : (TB, in_size)          bf16  (native features, no lane padding)
#   w_ref : (5, 128, 128)          bf16  (packed, zero-padded weights, resident)
#   b_ref : (5, 128)               f32   (packed, zero-padded biases, resident)
#   o_ref : (TB, 128)              f32   (lane-dense output tile)
# --------------------------------------------------------------------------
def actor_kernel(x_ref, w_ref, b_ref, o_ref):
    in_size = x_ref.shape[-1]

    # Layer 1: contract the native feature width against the top rows of the
    # zero-padded weight tile (static slice, tile-aligned for in_size=16).
    h = x_ref[...].astype(jnp.bfloat16)
    acc = jnp.dot(h, w_ref[0, :in_size, :], preferred_element_type=jnp.float32)
    acc = jnp.maximum(acc + b_ref[0:1, :], 0.0)          # f32 bias + ReLU

    # Layers 2..4: bf16 matmul operands, f32 accumulate / bias / ReLU.
    for layer in range(1, NUM_LAYERS - 1):
        h = acc.astype(jnp.bfloat16)
        acc = jnp.dot(h, w_ref[layer], preferred_element_type=jnp.float32)
        acc = jnp.maximum(acc + b_ref[layer:layer + 1, :], 0.0)

    # Layer 5: linear + tanh (f32).
    h = acc.astype(jnp.bfloat16)
    acc = jnp.dot(h, w_ref[NUM_LAYERS - 1], preferred_element_type=jnp.float32)
    o_ref[...] = jnp.tanh(acc + b_ref[NUM_LAYERS - 1:NUM_LAYERS, :]).astype(o_ref.dtype)


# --------------------------------------------------------------------------
# Parameter packing: 5 x (w, b) -> one zero-padded bf16 weight slab + f32 bias slab.
# Zero-padded rows/cols keep padded lanes at 0 through ReLU and tanh(0)=0.
# --------------------------------------------------------------------------
def pack_params(params):
    w_slab = jnp.zeros((NUM_LAYERS, LANE, LANE), jnp.float32)
    b_slab = jnp.zeros((NUM_LAYERS, LANE), jnp.float32)
    for i in range(1, NUM_LAYERS + 1):
        w = params[f"w{i}"]                     # (din, dout)
        b = params[f"b{i}"].reshape(-1)         # (dout,)
        din, dout = w.shape
        # NOTE: single-slab design requires every feature dim <= 128; with
        # hidden_size > 64 the 2*hidden layer would need a real K/N-tiled matmul.
        assert din <= LANE and dout <= LANE, "feature dims must fit in 128 lanes"
        w_slab = w_slab.at[i - 1, :din, :dout].set(w.astype(jnp.float32))
        b_slab = b_slab.at[i - 1, :dout].set(b.astype(jnp.float32))
    return w_slab.astype(jnp.bfloat16), b_slab


# --------------------------------------------------------------------------
# Forward: batch-tiled kernel over the native input, lane-dense 128-wide output.
# --------------------------------------------------------------------------
def actor_forward(x, w_slab, b_slab, out_size, batch_tile=2048):
    batch, in_size = x.shape
    tb = _choose_tb(batch, batch_tile)
    grid = (pl.cdiv(batch, tb),)                # ragged tail masked by Pallas

    # bf16 activations in HBM: cheap cast, halves the kernel's input stream.
    x_bf = x.astype(jnp.bfloat16)

    out_p = pl.pallas_call(
        actor_kernel,
        out_shape=jax.ShapeDtypeStruct((batch, LANE), jnp.float32),
        grid_spec=pltpu.PrefetchScalarGridSpec(
            num_scalar_prefetch=0,
            grid=grid,
            in_specs=[
                # activation tile: blocked over batch, native feature width
                # (last dim == full array dim, so the (8,128) rule is satisfied)
                pl.BlockSpec((tb, in_size), lambda i: (i, 0)),
                # packed bf16 weights: constant index_map -> DMA'd once, VMEM-resident
                pl.BlockSpec((NUM_LAYERS, LANE, LANE), lambda i: (0, 0, 0)),
                # packed f32 biases: constant index_map -> VMEM-resident
                pl.BlockSpec((NUM_LAYERS, LANE), lambda i: (0, 0)),
            ],
            out_specs=pl.BlockSpec((tb, LANE), lambda i: (i, 0)),
        ),
        compiler_params=pltpu.CompilerParams(
            dimension_semantics=("parallel",),      # megacore-shardable on v7x
            # Explicit and with large headroom: at tb=2048 the kernel uses
            # ~2.5 MB (double-buffered tiles + 160 KB bf16 weight slab),
            # far under v5e/v6e (128 MiB) and v7x (64 MiB physical).
            vmem_limit_bytes=32 * 1024 * 1024,
        ),
    )(x_bf, w_slab, b_slab)

    return out_p[:, :out_size]


# --------------------------------------------------------------------------
# Deterministic synthetic parameters (shapes mirror the PyTorch module).
# --------------------------------------------------------------------------
def init_params(key, input_size, hidden_size, output_size):
    dims = [
        (input_size, hidden_size),        # linear1
        (hidden_size, hidden_size),       # linear2
        (hidden_size, 2 * hidden_size),   # linear3
        (2 * hidden_size, hidden_size),   # linear4
        (hidden_size, output_size),       # linear5
    ]
    params = {}
    for i, (din, dout) in enumerate(dims, start=1):
        key, kw, kb = jax.random.split(key, 3)
        bound = 1.0 / jnp.sqrt(jnp.float32(din))
        params[f"w{i}"] = jax.random.uniform(
            kw, (din, dout), jnp.float32, -bound, bound)
        params[f"b{i}"] = jax.random.uniform(
            kb, (dout,), jnp.float32, -bound, bound)
    return params


def reference_forward(x, params):
    h = x.astype(jnp.float32)
    for i in range(1, NUM_LAYERS):
        h = jnp.maximum(h @ params[f"w{i}"] + params[f"b{i}"], 0.0)
    return jnp.tanh(h @ params[f"w{NUM_LAYERS}"] + params[f"b{NUM_LAYERS}"])


if __name__ == "__main__":
    key = jax.random.PRNGKey(0)
    k_x, k_p, k_x2 = jax.random.split(key, 3)

    batch, input_size, hidden_size, output_size = 8, 16, 32, 8
    x = jax.random.normal(k_x, (batch, input_size), jnp.float32)
    params = init_params(k_p, input_size, hidden_size, output_size)
    w_slab, b_slab = pack_params(params)

    # jit the wrapper so the bf16 cast and the output slice fuse around the kernel.
    actor_fn = jax.jit(actor_forward, static_argnames=("out_size", "batch_tile"))

    # Small-shape check (single grid step).
    out = jax.block_until_ready(actor_fn(x, w_slab, b_slab, out_size=output_size))
    ref = reference_forward(x, params)
    assert out.shape == (batch, output_size)
    err = float(jnp.max(jnp.abs(out - ref)))
    # bf16 matmul operands -> relaxed tolerance vs the exact-f32 reference.
    assert err < 5e-2, f"max abs err {err}"

    # Multi-tile check: batch=256 -> tb=128, grid=(2,) (exercises the
    # two-TensorCore 'parallel' split on v7x; plain 2-step pipeline elsewhere).
    batch2 = 256
    x2 = jax.random.normal(k_x2, (batch2, input_size), jnp.float32)
    out2 = jax.block_until_ready(actor_fn(x2, w_slab, b_slab, out_size=output_size))
    ref2 = reference_forward(x2, params)
    assert out2.shape == (batch2, output_size)
    err2 = float(jnp.max(jnp.abs(out2 - ref2)))
    assert err2 < 5e-2, f"max abs err {err2}"

    print("KERNEL_OK")
</pallas_src>

<mosaic_0001>
module attributes {stable_mosaic.version = 11 : i64} {
  func.func @actor_kernel(%arg0: i32, %arg1: memref<8x16xbf16, #tpu.memory_space<vmem>>, %arg2: memref<5x128x128xbf16, #tpu.memory_space<vmem>>, %arg3: memref<5x128xf32, #tpu.memory_space<vmem>>, %arg4: memref<8x128xf32, #tpu.memory_space<vmem>>) attributes {dimension_semantics = [#tpu.dimension_semantics<parallel>], iteration_bounds = array<i64: 1>, scalar_prefetch = 0 : i64, scratch_operands = 0 : i64, tpu.core_type = #tpu.core_type<tc>, window_params = [{transform_indices = @transform_0, window_bounds = array<i64: 8, 16>}, {pipeline_mode = #tpu.pipeline_mode<synchronous>, transform_indices = @transform_1, window_bounds = array<i64: 5, 128, 128>}, {pipeline_mode = #tpu.pipeline_mode<synchronous>, transform_indices = @transform_2, window_bounds = array<i64: 5, 128>}, {transform_indices = @transform_3, window_bounds = array<i64: 8, 128>}]} {
    %c0 = arith.constant 0 : index
    %c0_0 = arith.constant 0 : index
    %0 = vector.load %arg1[%c0, %c0_0] : memref<8x16xbf16, #tpu.memory_space<vmem>>, vector<8x16xbf16>
    %c0_1 = arith.constant 0 : index
    %c0_2 = arith.constant 0 : index
    %c0_3 = arith.constant 0 : index
    %1 = vector.load %arg2[%c0_1, %c0_2, %c0_3] : memref<5x128x128xbf16, #tpu.memory_space<vmem>>, vector<1x16x128xbf16>
    %2 = vector.shape_cast %1 : vector<1x16x128xbf16> to vector<16x128xbf16>
    %cst = arith.constant dense<0.000000e+00> : vector<8x128xf32>
    %3 = tpu.matmul %0, %2, %cst {dimension_numbers = #tpu.dot_dimension_numbers<[1], [0], [0], [1], [0, 0, 1, 1], [], []>} : vector<8x16xbf16>, vector<16x128xbf16>, vector<8x128xf32> -> vector<8x128xf32>
    %c0_4 = arith.constant 0 : index
    %c0_5 = arith.constant 0 : index
    %4 = vector.load %arg3[%c0_4, %c0_5] : memref<5x128xf32, #tpu.memory_space<vmem>>, vector<1x128xf32>
    %5 = vector.broadcast %4 : vector<1x128xf32> to vector<8x128xf32>
    %6 = arith.addf %3, %5 : vector<8x128xf32>
    %cst_6 = arith.constant 0.000000e+00 : f32
    %7 = vector.broadcast %cst_6 : f32 to vector<8x128xf32>
    %8 = arith.maximumf %6, %7 : vector<8x128xf32>
    %9 = arith.truncf %8 : vector<8x128xf32> to vector<8x128xbf16>
    %c1 = arith.constant 1 : index
    %c0_7 = arith.constant 0 : index
    %c0_8 = arith.constant 0 : index
    %10 = vector.load %arg2[%c1, %c0_7, %c0_8] : memref<5x128x128xbf16, #tpu.memory_space<vmem>>, vector<1x128x128xbf16>
    %11 = vector.shape_cast %10 : vector<1x128x128xbf16> to vector<128x128xbf16>
    %cst_9 = arith.constant dense<0.000000e+00> : vector<8x128xf32>
    %12 = tpu.matmul %9, %11, %cst_9 {dimension_numbers = #tpu.dot_dimension_numbers<[1], [0], [0], [1], [0, 0, 1, 1], [], []>} : vector<8x128xbf16>, vector<128x128xbf16>, vector<8x128xf32> -> vector<8x128xf32>
    %c1_10 = arith.constant 1 : index
    %c0_11 = arith.constant 0 : index
    %13 = vector.load %arg3[%c1_10, %c0_11] : memref<5x128xf32, #tpu.memory_space<vmem>>, vector<1x128xf32>
    %14 = vector.broadcast %13 : vector<1x128xf32> to vector<8x128xf32>
    %15 = arith.addf %12, %14 : vector<8x128xf32>
    %cst_12 = arith.constant 0.000000e+00 : f32
    %16 = vector.broadcast %cst_12 : f32 to vector<8x128xf32>
    %17 = arith.maximumf %15, %16 : vector<8x128xf32>
    %18 = arith.truncf %17 : vector<8x128xf32> to vector<8x128xbf16>
    %c2 = arith.constant 2 : index
    %c0_13 = arith.constant 0 : index
    %c0_14 = arith.constant 0 : index
    %19 = vector.load %arg2[%c2, %c0_13, %c0_14] : memref<5x128x128xbf16, #tpu.memory_space<vmem>>, vector<1x128x128xbf16>
    %20 = vector.shape_cast %19 : vector<1x128x128xbf16> to vector<128x128xbf16>
    %cst_15 = arith.constant dense<0.000000e+00> : vector<8x128xf32>
    %21 = tpu.matmul %18, %20, %cst_15 {dimension_numbers = #tpu.dot_dimension_numbers<[1], [0], [0], [1], [0, 0, 1, 1], [], []>} : vector<8x128xbf16>, vector<128x128xbf16>, vector<8x128xf32> -> vector<8x128xf32>
    %c2_16 = arith.constant 2 : index
    %c0_17 = arith.constant 0 : index
    %22 = vector.load %arg3[%c2_16, %c0_17] : memref<5x128xf32, #tpu.memory_space<vmem>>, vector<1x128xf32>
    %23 = vector.broadcast %22 : vector<1x128xf32> to vector<8x128xf32>
    %24 = arith.addf %21, %23 : vector<8x128xf32>
    %cst_18 = arith.constant 0.000000e+00 : f32
    %25 = vector.broadcast %cst_18 : f32 to vector<8x128xf32>
    %26 = arith.maximumf %24, %25 : vector<8x128xf32>
    %27 = arith.truncf %26 : vector<8x128xf32> to vector<8x128xbf16>
    %c3 = arith.constant 3 : index
    %c0_19 = arith.constant 0 : index
    %c0_20 = arith.constant 0 : index
    %28 = vector.load %arg2[%c3, %c0_19, %c0_20] : memref<5x128x128xbf16, #tpu.memory_space<vmem>>, vector<1x128x128xbf16>
    %29 = vector.shape_cast %28 : vector<1x128x128xbf16> to vector<128x128xbf16>
    %cst_21 = arith.constant dense<0.000000e+00> : vector<8x128xf32>
    %30 = tpu.matmul %27, %29, %cst_21 {dimension_numbers = #tpu.dot_dimension_numbers<[1], [0], [0], [1], [0, 0, 1, 1], [], []>} : vector<8x128xbf16>, vector<128x128xbf16>, vector<8x128xf32> -> vector<8x128xf32>
    %c3_22 = arith.constant 3 : index
    %c0_23 = arith.constant 0 : index
    %31 = vector.load %arg3[%c3_22, %c0_23] : memref<5x128xf32, #tpu.memory_space<vmem>>, vector<1x128xf32>
    %32 = vector.broadcast %31 : vector<1x128xf32> to vector<8x128xf32>
    %33 = arith.addf %30, %32 : vector<8x128xf32>
    %cst_24 = arith.constant 0.000000e+00 : f32
    %34 = vector.broadcast %cst_24 : f32 to vector<8x128xf32>
    %35 = arith.maximumf %33, %34 : vector<8x128xf32>
    %36 = arith.truncf %35 : vector<8x128xf32> to vector<8x128xbf16>
    %c4 = arith.constant 4 : index
    %c0_25 = arith.constant 0 : index
    %c0_26 = arith.constant 0 : index
    %37 = vector.load %arg2[%c4, %c0_25, %c0_26] : memref<5x128x128xbf16, #tpu.memory_space<vmem>>, vector<1x128x128xbf16>
    %38 = vector.shape_cast %37 : vector<1x128x128xbf16> to vector<128x128xbf16>
    %cst_27 = arith.constant dense<0.000000e+00> : vector<8x128xf32>
    %39 = tpu.matmul %36, %38, %cst_27 {dimension_numbers = #tpu.dot_dimension_numbers<[1], [0], [0], [1], [0, 0, 1, 1], [], []>} : vector<8x128xbf16>, vector<128x128xbf16>, vector<8x128xf32> -> vector<8x128xf32>
    %c4_28 = arith.constant 4 : index
    %c0_29 = arith.constant 0 : index
    %40 = vector.load %arg3[%c4_28, %c0_29] : memref<5x128xf32, #tpu.memory_space<vmem>>, vector<1x128xf32>
    %41 = vector.broadcast %40 : vector<1x128xf32> to vector<8x128xf32>
    %42 = arith.addf %39, %41 : vector<8x128xf32>
    %43 = math.tanh %42 : vector<8x128xf32>
    %c0_30 = arith.constant 0 : index
    %c0_31 = arith.constant 0 : index
    %44 = vector.load %arg4[%c0_30, %c0_31] : memref<8x128xf32, #tpu.memory_space<vmem>>, vector<8x128xf32>
    tpu.vector_store %arg4[%c0_30, %c0_31], %43 {strides = array<i32>} : memref<8x128xf32, #tpu.memory_space<vmem>>, vector<8x128xf32>,
    return
  }
  func.func @transform_0(%arg0: i32) -> (i32, i32) {
    %c0_i32 = arith.constant 0 : i32
    %c0_i32_0 = arith.constant 0 : i32
    return %arg0, %c0_i32 : i32, i32
  }
  func.func @transform_1(%arg0: i32) -> (i32, i32, i32) {
    %c0_i32 = arith.constant 0 : i32
    %c0_i32_0 = arith.constant 0 : i32
    %c0_i32_1 = arith.constant 0 : i32
    %c0_i32_2 = arith.constant 0 : i32
    return %c0_i32, %c0_i32_0, %c0_i32_1 : i32, i32, i32
  }
  func.func @transform_2(%arg0: i32) -> (i32, i32) {
    %c0_i32 = arith.constant 0 : i32
    %c0_i32_0 = arith.constant 0 : i32
    %c0_i32_1 = arith.constant 0 : i32
    return %c0_i32, %c0_i32_0 : i32, i32
  }
  func.func @transform_3(%arg0: i32) -> (i32, i32) {
    %c0_i32 = arith.constant 0 : i32
    %c0_i32_0 = arith.constant 0 : i32
    return %arg0, %c0_i32 : i32, i32
  }
}

</mosaic_0001>

<llo_original>
// kernel: actor_forward.1
$region0: #{actor_forward.1}
  #allocation0 [shape = 'u32[]', space=smem, size = 0x4, offset = 0x4, fixed_abs, tag = 'smem constant byte address 0x4 - core index']
  #allocation1 [shape = 'u32[144,128]{1,0:T(1,128)}', space=vmem, size = 0x12000, scoped, tag = 'internal scratch']
  %s0 = inlined_call_operand.vmem [shape: bf16[8,16], index: 0, kind: input, shape index: {}]
  %s1 = inlined_call_operand.hbm [shape: bf16[5,128,128], index: 1, kind: input, shape index: {}]
  %s2 = inlined_call_operand.vmem [shape: f32[5,128], index: 2, kind: input, shape index: {}]
  %s3 = inlined_call_operand.hbm [shape: f32[8,128], index: 3, kind: output, shape index: {}]
  %s4 = sld [smem:[#allocation0]]
  $region26: #{actor_forward.1} parent=0
    _
  %s6 = ssub.s32 1, %s4
  %s7 = scalar_select 0, %s6, %s4
  $region1: #{actor_forward.1} parent=0
    #allocation2 [shape = 'u8[163840]{0}', space=vmem, size = 0x28000, scoped, tag = 'input window, operand 1, single buffered']
    #allocation3 [shape = 's32[1]{0}', space=sflag, size = 0x4, scoped, tag = 'scoped memory for actor_forward.1']
    #allocation4 [shape = 's32[1]{0}', space=sflag, size = 0x4, scoped, tag = 'scoped memory for actor_forward.1']
    #allocation5 [shape = 'u8[4096]{0}', space=vmem, size = 0x1000, scoped, tag = 'output window, operand 0, single buffered']
    %8 = vsyncpa [#allocation3], 0
    %9 = vsyncpa [#allocation4], 0
    // Predicated region
    $region2: #{actor_forward.1} parent=1 // pred_check
      _
    $region3: #{actor_forward.1} parent=1 // pred_check_branch
      %11 = sbr.rel (0) target = $region5
    $region4: #{actor_forward.1} parent=1 // pred_region
      _
    $region5: #{actor_forward.1} parent=1 // pred_fallthru
      _
    // Predicated region
    $region6: #{actor_forward.1} parent=1 // pred_check
      _
    $region7: #{actor_forward.1} parent=1 // pred_check_branch
      %13 = sbr.rel (0) target = $region9
    $region8: #{actor_forward.1} parent=1 // pred_region
      %s15 = ssub.s32 5120, 5120
      %16 = vsyncadd [#allocation3], %s15
      %s17 = sshll.u32 [#allocation2], 4
      %s18 = int_to_ptr.vmem [resolvable:$true] %s17
      %23 = dma.hbm_to_vmem [thread:$0]  %s1, 5120, %s18, [#allocation3], 64, 64, 4
    $region9: #{actor_forward.1} parent=1 // pred_fallthru
      _
    // Predicated region
    $region10: #{actor_forward.1} parent=1 // pred_check
      _
    $region11: #{actor_forward.1} parent=1 // pred_check_branch
      %25 = sbr.rel (0) target = $region13
    $region12: #{actor_forward.1} parent=1 // pred_region
      _
    $region13: #{actor_forward.1} parent=1 // pred_fallthru
      _
    // Predicated region
    $region14: #{actor_forward.1} parent=1 // pred_check
      _
    $region15: #{actor_forward.1} parent=1 // pred_check_branch
      %27 = sbr.rel (0) target = $region17
    $region16: #{actor_forward.1} parent=1 // pred_region
      %28 = dma.done [#allocation3], 5120
    $region17: #{actor_forward.1} parent=1 // pred_fallthru
      _
    %v30 = vld [vmem:[%s0] sm:$0xf]
    %v31 = vld [vmem:[#allocation2] sm:$0xf]
    %v32 = vld [vmem:[#allocation2 + $0x4] sm:$0xf]
    %v33 = vld [vmem:[%s2] sm:$0x1]
    %v34 = vlaneseq
    %v35 = vshrl.u32 %v34, 7
    %v36 = vsub.s32 0, %v35
    %v37 = vrot.slane %v33, %v36
    %v40 = vunpack.c.l.b16 %v31
    %v41 = vunpack.c.l.b16 %v32
    %v42 = vpack.c.b16 %v41, %v40
    %vm44 = vcmask 130048
    %v46 = vsel %vm44, %v30, 0
    %48 = vmatprep.subr.bf16.mxu0 0
    %49 = vmatpush1.bf16.msra.mxu0 0
    %50 = vmatprep.subr.bf16.mxu0 0
    %51 = vmatpush1.bf16.msra.mxu0 0
    %52 = vmatprep.subr.bf16.mxu0 0
    %53 = vmatpush1.bf16.msra.mxu0 0
    %54 = vmatprep.subr.bf16.mxu0 0
    %55 = vmatpush1.bf16.msra.mxu0 0
    %56 = vmatprep.subr.bf16.mxu0 0
    %57 = vmatpush1.bf16.msra.mxu0 0
    %58 = vmatprep.subr.bf16.mxu0 0
    %59 = vmatpush1.bf16.msra.mxu0 0
    %60 = vmatprep.subr.bf16.mxu0 0
    %61 = vmatpush1.bf16.msra.mxu0 0
    %62 = vmatprep.subr.bf16.mxu0 0
    %63 = vmatpush1.bf16.msra.mxu0 %v42
    %64 = vmatprep.subr.bf16.mxu0 0
    %65 = vmatpush2.bf16.msra.mxu0 0
    %66 = vmatprep.subr.bf16.mxu0 0
    %67 = vmatpush2.bf16.msra.mxu0 0
    %68 = vmatprep.subr.bf16.mxu0 0
    %69 = vmatpush2.bf16.msra.mxu0 0
    %70 = vmatprep.subr.bf16.mxu0 0
    %71 = vmatpush2.bf16.msra.mxu0 0
    %72 = vmatprep.subr.bf16.mxu0 0
    %73 = vmatpush2.bf16.msra.mxu0 0
    %74 = vmatprep.subr.bf16.mxu0 0
    %75 = vmatpush2.bf16.msra.mxu0 0
    %76 = vmatprep.subr.bf16.mxu0 0
    %77 = vmatpush2.bf16.msra.mxu0 0
    %78 = vmatprep.subr.bf16.mxu0 0
    %79 = vmatpush2.bf16.msra.mxu0 0
    %80 = vmatprep.mubr.bf16.mxu0 0
    %81 = vmatmul.mubr.bf16.gmra.mxu0 %v46
    %v82 = vpop.f32.mrf.mxu0
    %v83 = vadd.f32 %v37, %v82
    %v84 = vpop.f32.mrf.mxu0
    %v85 = vpop.f32.mrf.mxu0
    %v86 = vpop.f32.mrf.mxu0
    %87 = vdwg.mxu0
    %v88 = vmax.f32 %v83, 0.0
    %v89 = vpack.c.bf16 %v88, %v88
    %s90 = scalar_lea.vmem [#allocation2], 64
    %v91 = vld [vmem:[%s90] sm:$0xf]
    %v92 = vld [vmem:[%s90 + $0x4] sm:$0xf]
    %v93 = vld [vmem:[%s90 + $0x8] sm:$0xf]
    %v94 = vld [vmem:[%s90 + $0xc] sm:$0xf]
    %v95 = vld [vmem:[%s90 + $0x10] sm:$0xf]
    %v96 = vld [vmem:[%s90 + $0x14] sm:$0xf]
    %v97 = vld [vmem:[%s90 + $0x18] sm:$0xf]
    %v98 = vld [vmem:[%s90 + $0x1c] sm:$0xf]
    %v99 = vld [vmem:[%s90 + $0x20] sm:$0xf]
    %v100 = vld [vmem:[%s90 + $0x24] sm:$0xf]
    %v101 = vld [vmem:[%s90 + $0x28] sm:$0xf]
    %v102 = vld [vmem:[%s90 + $0x2c] sm:$0xf]
    %v103 = vld [vmem:[%s90 + $0x30] sm:$0xf]
    %v104 = vld [vmem:[%s90 + $0x34] sm:$0xf]
    %v105 = vld [vmem:[%s90 + $0x38] sm:$0xf]
    %v106 = vld [vmem:[%s90 + $0x3c] sm:$0xf]
    %v107 = vld [vmem:[%s2 + $0x1] sm:$0x1]
    %v108 = vlaneseq
    %v109 = vshrl.u32 %v108, 7
    %v110 = vsub.s32 0, %v109
    %v111 = vrot.slane %v107, %v110
    %v128 = vunpack.c.l.b16 %v91
    %v129 = vunpack.c.l.b16 %v92
    %v130 = vunpack.c.l.b16 %v93
    %v131 = vunpack.c.l.b16 %v94
    %v132 = vunpack.c.l.b16 %v95
    %v133 = vunpack.c.l.b16 %v96
    %v134 = vunpack.c.l.b16 %v97
    %v135 = vunpack.c.l.b16 %v98
    %v136 = vunpack.c.l.b16 %v99
    %v137 = vunpack.c.l.b16 %v100
    %v138 = vunpack.c.l.b16 %v101
    %v139 = vunpack.c.l.b16 %v102
    %v140 = vunpack.c.l.b16 %v103
    %v141 = vunpack.c.l.b16 %v104
    %v142 = vunpack.c.l.b16 %v105
    %v143 = vunpack.c.l.b16 %v106
    %v144 = vpack.c.b16 %v129, %v128
    %v145 = vpack.c.b16 %v131, %v130
    %v146 = vpack.c.b16 %v133, %v132
    %v147 = vpack.c.b16 %v135, %v134
    %v148 = vpack.c.b16 %v137, %v136
    %v149 = vpack.c.b16 %v139, %v138
    %v150 = vpack.c.b16 %v141, %v140
    %v151 = vpack.c.b16 %v143, %v142
    %160 = vmatprep.subr.bf16.mxu0 0
    %161 = vmatpush1.bf16.msra.mxu0 %v151
    %162 = vmatprep.subr.bf16.mxu0 0
    %163 = vmatpush1.bf16.msra.mxu0 %v150
    %164 = vmatprep.subr.bf16.mxu0 0
    %165 = vmatpush1.bf16.msra.mxu0 %v149
    %166 = vmatprep.subr.bf16.mxu0 0
    %167 = vmatpush1.bf16.msra.mxu0 %v148
    %168 = vmatprep.subr.bf16.mxu0 0
    %169 = vmatpush1.bf16.msra.mxu0 %v147
    %170 = vmatprep.subr.bf16.mxu0 0
    %171 = vmatpush1.bf16.msra.mxu0 %v146
    %172 = vmatprep.subr.bf16.mxu0 0
    %173 = vmatpush1.bf16.msra.mxu0 %v145
    %174 = vmatprep.subr.bf16.mxu0 0
    %175 = vmatpush1.bf16.msra.mxu0 %v144
    %176 = vmatprep.subr.bf16.mxu0 0
    %177 = vmatpush2.bf16.msra.mxu0 0
    %178 = vmatprep.subr.bf16.mxu0 0
    %179 = vmatpush2.bf16.msra.mxu0 0
    %180 = vmatprep.subr.bf16.mxu0 0
    %181 = vmatpush2.bf16.msra.mxu0 0
    %182 = vmatprep.subr.bf16.mxu0 0
    %183 = vmatpush2.bf16.msra.mxu0 0
    %184 = vmatprep.subr.bf16.mxu0 0
    %185 = vmatpush2.bf16.msra.mxu0 0
    %186 = vmatprep.subr.bf16.mxu0 0
    %187 = vmatpush2.bf16.msra.mxu0 0
    %188 = vmatprep.subr.bf16.mxu0 0
    %189 = vmatpush2.bf16.msra.mxu0 0
    %190 = vmatprep.subr.bf16.mxu0 0
    %191 = vmatpush2.bf16.msra.mxu0 0
    %192 = vmatprep.mubr.bf16.mxu0 0
    %193 = vmatmul.mubr.bf16.gmra.mxu0 %v89
    %v194 = vpop.f32.mrf.mxu0
    %v195 = vadd.f32 %v111, %v194
    %v196 = vpop.f32.mrf.mxu0
    %v197 = vpop.f32.mrf.mxu0
    %v198 = vpop.f32.mrf.mxu0
    %199 = vdwg.mxu0
    %v200 = vmax.f32 %v195, 0.0
    %v201 = vpack.c.bf16 %v200, %v200
    %s202 = scalar_lea.vmem [#allocation2], 128
    %v203 = vld [vmem:[%s202] sm:$0xf]
    %v204 = vld [vmem:[%s202 + $0x4] sm:$0xf]
    %v205 = vld [vmem:[%s202 + $0x8] sm:$0xf]
    %v206 = vld [vmem:[%s202 + $0xc] sm:$0xf]
    %v207 = vld [vmem:[%s202 + $0x10] sm:$0xf]
    %v208 = vld [vmem:[%s202 + $0x14] sm:$0xf]
    %v209 = vld [vmem:[%s202 + $0x18] sm:$0xf]
    %v210 = vld [vmem:[%s202 + $0x1c] sm:$0xf]
    %v211 = vld [vmem:[%s202 + $0x20] sm:$0xf]
    %v212 = vld [vmem:[%s202 + $0x24] sm:$0xf]
    %v213 = vld [vmem:[%s202 + $0x28] sm:$0xf]
    %v214 = vld [vmem:[%s202 + $0x2c] sm:$0xf]
    %v215 = vld [vmem:[%s202 + $0x30] sm:$0xf]
    %v216 = vld [vmem:[%s202 + $0x34] sm:$0xf]
    %v217 = vld [vmem:[%s202 + $0x38] sm:$0xf]
    %v218 = vld [vmem:[%s202 + $0x3c] sm:$0xf]
    %v219 = vld [vmem:[%s2 + $0x2] sm:$0x1]
    %v220 = vlaneseq
    %v221 = vshrl.u32 %v220, 7
    %v222 = vsub.s32 0, %v221
    %v223 = vrot.slane %v219, %v222
    %v240 = vunpack.c.l.b16 %v203
    %v241 = vunpack.c.l.b16 %v204
    %v242 = vunpack.c.l.b16 %v205
    %v243 = vunpack.c.l.b16 %v206
    %v244 = vunpack.c.l.b16 %v207
    %v245 = vunpack.c.l.b16 %v208
    %v246 = vunpack.c.l.b16 %v209
    %v247 = vunpack.c.l.b16 %v210
    %v248 = vunpack.c.l.b16 %v211
    %v249 = vunpack.c.l.b16 %v212
    %v250 = vunpack.c.l.b16 %v213
    %v251 = vunpack.c.l.b16 %v214
    %v252 = vunpack.c.l.b16 %v215
    %v253 = vunpack.c.l.b16 %v216
    %v254 = vunpack.c.l.b16 %v217
    %v255 = vunpack.c.l.b16 %v218
    %v256 = vpack.c.b16 %v241, %v240
    %v257 = vpack.c.b16 %v243, %v242
    %v258 = vpack.c.b16 %v245, %v244
    %v259 = vpack.c.b16 %v247, %v246
    %v260 = vpack.c.b16 %v249, %v248
    %v261 = vpack.c.b16 %v251, %v250
    %v262 = vpack.c.b16 %v253, %v252
    %v263 = vpack.c.b16 %v255, %v254
    %272 = vmatprep.subr.bf16.mxu0 0
    %273 = vmatpush1.bf16.msra.mxu0 %v263
    %274 = vmatprep.subr.bf16.mxu0 0
    %275 = vmatpush1.bf16.msra.mxu0 %v262
    %276 = vmatprep.subr.bf16.mxu0 0
    %277 = vmatpush1.bf16.msra.mxu0 %v261
    %278 = vmatprep.subr.bf16.mxu0 0
    %279 = vmatpush1.bf16.msra.mxu0 %v260
    %280 = vmatprep.subr.bf16.mxu0 0
    %281 = vmatpush1.bf16.msra.mxu0 %v259
    %282 = vmatprep.subr.bf16.mxu0 0
    %283 = vmatpush1.bf16.msra.mxu0 %v258
    %284 = vmatprep.subr.bf16.mxu0 0
    %285 = vmatpush1.bf16.msra.mxu0 %v257
    %286 = vmatprep.subr.bf16.mxu0 0
    %287 = vmatpush1.bf16.msra.mxu0 %v256
    %288 = vmatprep.subr.bf16.mxu0 0
    %289 = vmatpush2.bf16.msra.mxu0 0
    %290 = vmatprep.subr.bf16.mxu0 0
    %291 = vmatpush2.bf16.msra.mxu0 0
    %292 = vmatprep.subr.bf16.mxu0 0
    %293 = vmatpush2.bf16.msra.mxu0 0
    %294 = vmatprep.subr.bf16.mxu0 0
    %295 = vmatpush2.bf16.msra.mxu0 0
    %296 = vmatprep.subr.bf16.mxu0 0
    %297 = vmatpush2.bf16.msra.mxu0 0
    %298 = vmatprep.subr.bf16.mxu0 0
    %299 = vmatpush2.bf16.msra.mxu0 0
    %300 = vmatprep.subr.bf16.mxu0 0
    %301 = vmatpush2.bf16.msra.mxu0 0
    %302 = vmatprep.subr.bf16.mxu0 0
    %303 = vmatpush2.bf16.msra.mxu0 0
    %304 = vmatprep.mubr.bf16.mxu0 0
    %305 = vmatmul.mubr.bf16.gmra.mxu0 %v201
    %v306 = vpop.f32.mrf.mxu0
    %v307 = vadd.f32 %v223, %v306
    %v308 = vpop.f32.mrf.mxu0
    %v309 = vpop.f32.mrf.mxu0
    %v310 = vpop.f32.mrf.mxu0
    %311 = vdwg.mxu0
    %v312 = vmax.f32 %v307, 0.0
    %v313 = vpack.c.bf16 %v312, %v312
    %s314 = scalar_lea.vmem [#allocation2], 192
    %v315 = vld [vmem:[%s314] sm:$0xf]
    %v316 = vld [vmem:[%s314 + $0x4] sm:$0xf]
    %v317 = vld [vmem:[%s314 + $0x8] sm:$0xf]
    %v318 = vld [vmem:[%s314 + $0xc] sm:$0xf]
    %v319 = vld [vmem:[%s314 + $0x10] sm:$0xf]
    %v320 = vld [vmem:[%s314 + $0x14] sm:$0xf]
    %v321 = vld [vmem:[%s314 + $0x18] sm:$0xf]
    %v322 = vld [vmem:[%s314 + $0x1c] sm:$0xf]
    %v323 = vld [vmem:[%s314 + $0x20] sm:$0xf]
    %v324 = vld [vmem:[%s314 + $0x24] sm:$0xf]
    %v325 = vld [vmem:[%s314 + $0x28] sm:$0xf]
    %v326 = vld [vmem:[%s314 + $0x2c] sm:$0xf]
    %v327 = vld [vmem:[%s314 + $0x30] sm:$0xf]
    %v328 = vld [vmem:[%s314 + $0x34] sm:$0xf]
    %v329 = vld [vmem:[%s314 + $0x38] sm:$0xf]
    %v330 = vld [vmem:[%s314 + $0x3c] sm:$0xf]
    %v331 = vld [vmem:[%s2 + $0x3] sm:$0x1]
    %v332 = vlaneseq
    %v333 = vshrl.u32 %v332, 7
    %v334 = vsub.s32 0, %v333
    %v335 = vrot.slane %v331, %v334
    %v352 = vunpack.c.l.b16 %v315
    %v353 = vunpack.c.l.b16 %v316
    %v354 = vunpack.c.l.b16 %v317
    %v355 = vunpack.c.l.b16 %v318
    %v356 = vunpack.c.l.b16 %v319
    %v357 = vunpack.c.l.b16 %v320
    %v358 = vunpack.c.l.b16 %v321
    %v359 = vunpack.c.l.b16 %v322
    %v360 = vunpack.c.l.b16 %v323
    %v361 = vunpack.c.l.b16 %v324
    %v362 = vunpack.c.l.b16 %v325
    %v363 = vunpack.c.l.b16 %v326
    %v364 = vunpack.c.l.b16 %v327
    %v365 = vunpack.c.l.b16 %v328
    %v366 = vunpack.c.l.b16 %v329
    %v367 = vunpack.c.l.b16 %v330
    %v368 = vpack.c.b16 %v353, %v352
    %v369 = vpack.c.b16 %v355, %v354
    %v370 = vpack.c.b16 %v357, %v356
    %v371 = vpack.c.b16 %v359, %v358
    %v372 = vpack.c.b16 %v361, %v360
    %v373 = vpack.c.b16 %v363, %v362
    %v374 = vpack.c.b16 %v365, %v364
    %v375 = vpack.c.b16 %v367, %v366
    %384 = vmatprep.subr.bf16.mxu0 0
    %385 = vmatpush1.bf16.msra.mxu0 %v375
    %386 = vmatprep.subr.bf16.mxu0 0
    %387 = vmatpush1.bf16.msra.mxu0 %v374
    %388 = vmatprep.subr.bf16.mxu0 0
    %389 = vmatpush1.bf16.msra.mxu0 %v373
    %390 = vmatprep.subr.bf16.mxu0 0
    %391 = vmatpush1.bf16.msra.mxu0 %v372
    %392 = vmatprep.subr.bf16.mxu0 0
    %393 = vmatpush1.bf16.msra.mxu0 %v371
    %394 = vmatprep.subr.bf16.mxu0 0
    %395 = vmatpush1.bf16.msra.mxu0 %v370
    %396 = vmatprep.subr.bf16.mxu0 0
    %397 = vmatpush1.bf16.msra.mxu0 %v369
    %398 = vmatprep.subr.bf16.mxu0 0
    %399 = vmatpush1.bf16.msra.mxu0 %v368
    %400 = vmatprep.subr.bf16.mxu0 0
    %401 = vmatpush2.bf16.msra.mxu0 0
    %402 = vmatprep.subr.bf16.mxu0 0
    %403 = vmatpush2.bf16.msra.mxu0 0
    %404 = vmatprep.subr.bf16.mxu0 0
    %405 = vmatpush2.bf16.msra.mxu0 0
    %406 = vmatprep.subr.bf16.mxu0 0
    %407 = vmatpush2.bf16.msra.mxu0 0
    %408 = vmatprep.subr.bf16.mxu0 0
    %409 = vmatpush2.bf16.msra.mxu0 0
    %410 = vmatprep.subr.bf16.mxu0 0
    %411 = vmatpush2.bf16.msra.mxu0 0
    %412 = vmatprep.subr.bf16.mxu0 0
    %413 = vmatpush2.bf16.msra.mxu0 0
    %414 = vmatprep.subr.bf16.mxu0 0
    %415 = vmatpush2.bf16.msra.mxu0 0
    %416 = vmatprep.mubr.bf16.mxu0 0
    %417 = vmatmul.mubr.bf16.gmra.mxu0 %v313
    %v418 = vpop.f32.mrf.mxu0
    %v419 = vadd.f32 %v335, %v418
    %v420 = vpop.f32.mrf.mxu0
    %v421 = vpop.f32.mrf.mxu0
    %v422 = vpop.f32.mrf.mxu0
    %423 = vdwg.mxu0
    %v424 = vmax.f32 %v419, 0.0
    %v425 = vpack.c.bf16 %v424, %v424
    %s426 = scalar_lea.vmem [#allocation2], 256
    %v427 = vld [vmem:[%s426] sm:$0xf]
    %v428 = vld [vmem:[%s426 + $0x4] sm:$0xf]
    %v429 = vld [vmem:[%s426 + $0x8] sm:$0xf]
    %v430 = vld [vmem:[%s426 + $0xc] sm:$0xf]
    %v431 = vld [vmem:[%s426 + $0x10] sm:$0xf]
    %v432 = vld [vmem:[%s426 + $0x14] sm:$0xf]
    %v433 = vld [vmem:[%s426 + $0x18] sm:$0xf]
    %v434 = vld [vmem:[%s426 + $0x1c] sm:$0xf]
    %v435 = vld [vmem:[%s426 + $0x20] sm:$0xf]
    %v436 = vld [vmem:[%s426 + $0x24] sm:$0xf]
    %v437 = vld [vmem:[%s426 + $0x28] sm:$0xf]
    %v438 = vld [vmem:[%s426 + $0x2c] sm:$0xf]
    %v439 = vld [vmem:[%s426 + $0x30] sm:$0xf]
    %v440 = vld [vmem:[%s426 + $0x34] sm:$0xf]
    %v441 = vld [vmem:[%s426 + $0x38] sm:$0xf]
    %v442 = vld [vmem:[%s426 + $0x3c] sm:$0xf]
    %v443 = vld [vmem:[%s2 + $0x4] sm:$0x1]
    %v444 = vlaneseq
    %v445 = vshrl.u32 %v444, 7
    %v446 = vsub.s32 0, %v445
    %v447 = vrot.slane %v443, %v446
    %v464 = vunpack.c.l.b16 %v427
    %v465 = vunpack.c.l.b16 %v428
    %v466 = vunpack.c.l.b16 %v429
    %v467 = vunpack.c.l.b16 %v430
    %v468 = vunpack.c.l.b16 %v431
    %v469 = vunpack.c.l.b16 %v432
    %v470 = vunpack.c.l.b16 %v433
    %v471 = vunpack.c.l.b16 %v434
    %v472 = vunpack.c.l.b16 %v435
    %v473 = vunpack.c.l.b16 %v436
    %v474 = vunpack.c.l.b16 %v437
    %v475 = vunpack.c.l.b16 %v438
    %v476 = vunpack.c.l.b16 %v439
    %v477 = vunpack.c.l.b16 %v440
    %v478 = vunpack.c.l.b16 %v441
    %v479 = vunpack.c.l.b16 %v442
    %v480 = vpack.c.b16 %v465, %v464
    %v481 = vpack.c.b16 %v467, %v466
    %v482 = vpack.c.b16 %v469, %v468
    %v483 = vpack.c.b16 %v471, %v470
    %v484 = vpack.c.b16 %v473, %v472
    %v485 = vpack.c.b16 %v475, %v474
    %v486 = vpack.c.b16 %v477, %v476
    %v487 = vpack.c.b16 %v479, %v478
    %496 = vmatprep.subr.bf16.mxu0 0
    %497 = vmatpush1.bf16.msra.mxu0 %v487
    %498 = vmatprep.subr.bf16.mxu0 0
    %499 = vmatpush1.bf16.msra.mxu0 %v486
    %500 = vmatprep.subr.bf16.mxu0 0
    %501 = vmatpush1.bf16.msra.mxu0 %v485
    %502 = vmatprep.subr.bf16.mxu0 0
    %503 = vmatpush1.bf16.msra.mxu0 %v484
    %504 = vmatprep.subr.bf16.mxu0 0
    %505 = vmatpush1.bf16.msra.mxu0 %v483
    %506 = vmatprep.subr.bf16.mxu0 0
    %507 = vmatpush1.bf16.msra.mxu0 %v482
    %508 = vmatprep.subr.bf16.mxu0 0
    %509 = vmatpush1.bf16.msra.mxu0 %v481
    %510 = vmatprep.subr.bf16.mxu0 0
    %511 = vmatpush1.bf16.msra.mxu0 %v480
    %512 = vmatprep.subr.bf16.mxu0 0
    %513 = vmatpush2.bf16.msra.mxu0 0
    %514 = vmatprep.subr.bf16.mxu0 0
    %515 = vmatpush2.bf16.msra.mxu0 0
    %516 = vmatprep.subr.bf16.mxu0 0
    %517 = vmatpush2.bf16.msra.mxu0 0
    %518 = vmatprep.subr.bf16.mxu0 0
    %519 = vmatpush2.bf16.msra.mxu0 0
    %520 = vmatprep.subr.bf16.mxu0 0
    %521 = vmatpush2.bf16.msra.mxu0 0
    %522 = vmatprep.subr.bf16.mxu0 0
    %523 = vmatpush2.bf16.msra.mxu0 0
    %524 = vmatprep.subr.bf16.mxu0 0
    %525 = vmatpush2.bf16.msra.mxu0 0
    %526 = vmatprep.subr.bf16.mxu0 0
    %527 = vmatpush2.bf16.msra.mxu0 0
    %528 = vmatprep.mubr.bf16.mxu0 0
    %529 = vmatmul.mubr.bf16.gmra.mxu0 %v425
    %v530 = vpop.f32.mrf.mxu0
    %v531 = vadd.f32 %v447, %v530
    %v532 = vpop.f32.mrf.mxu0
    %v533 = vpop.f32.mrf.mxu0
    %v534 = vpop.f32.mrf.mxu0
    %535 = vdwg.mxu0
    %v536 = vtanh.pop %v531
    %537 = vst [vmem:[#allocation5] sm:$0xff] %v536
    // Predicated region
    $region18: #{actor_forward.1} parent=1 // pred_check
      _
    $region19: #{actor_forward.1} parent=1 // pred_check_branch
      %539 = sbr.rel (0) target = $region21
    $region20: #{actor_forward.1} parent=1 // pred_region
      %s541 = ssub.s32 128, 128
      %542 = vsyncadd [#allocation4], %s541
      %s544 = sshll.u32 [#allocation5], 4
      %s545 = int_to_ptr.vmem [resolvable:$true] %s544
      %547 = dma.vmem_to_hbm [thread:$0]  %s545, 128, %s3, [#allocation4]
    $region21: #{actor_forward.1} parent=1 // pred_fallthru
      _
    // Predicated region
    $region22: #{actor_forward.1} parent=1 // pred_check
      _
    $region23: #{actor_forward.1} parent=1 // pred_check_branch
      %549 = sbr.rel (0) target = $region25
    $region24: #{actor_forward.1} parent=1 // pred_region
      %550 = dma.done [#allocation4], 128
    $region25: #{actor_forward.1} parent=1 // pred_fallthru
      _
    %551 = vsyncpa [#allocation3], 1
    %552 = vsyncpa [#allocation4], 1

</llo_original>
